<compile_context>
chip_gen: v6e
topology: v6e:2x2x1
jax: 0.10.0
libtpu: 0.0.40
codegen_flags: <defaults>
</compile_context>

<pallas_src>
import functools
import math

import jax
import jax.numpy as jnp
from jax.experimental import pallas as pl
from jax.experimental.pallas import tpu as pltpu


# --------------------------------------------------------------------------- #
# Kernel body
# --------------------------------------------------------------------------- #
def _fused_decay_filter_kernel(h_ref, r_ref, o_ref, *, block_l):
    """out = h * exp(neg_scaled_rate * global_col); decay rebuilt in-kernel."""
    col0 = pl.program_id(1) * block_l
    # (1, block_l) row of global column indices; int32->f32 exact for L < 2^24.
    t_row = (jax.lax.broadcasted_iota(jnp.int32, (1, block_l), 1) + col0).astype(
        jnp.float32
    )
    decay = jnp.exp(r_ref[...] * t_row)  # (block_d, 1) x (1, block_l) -> tile
    o_ref[...] = (h_ref[...].astype(jnp.float32) * decay).astype(o_ref.dtype)


# --------------------------------------------------------------------------- #
# Chip / tiling heuristics
# --------------------------------------------------------------------------- #
@functools.lru_cache(maxsize=1)
def _vmem_capacity_bytes():
    """Physical VMEM per TensorCore; conservative fallback = 64 MiB (v7x)."""
    try:
        info = pltpu.get_tpu_info()
    except Exception:
        return 64 << 20
    for name in ("vmem_capacity_bytes", "vmem_size_bytes", "vmem_bytes"):
        v = getattr(info, name, None)
        if isinstance(v, int) and v > 0:
            return v
    return 64 << 20


def _chip_tile_params():
    """(target h-tile bytes, vmem_limit ceiling) per chip generation."""
    vmem_cap = _vmem_capacity_bytes()
    if vmem_cap > (96 << 20):  # v5e / v6e: 128 MiB physical VMEM
        return (8 << 20), (80 << 20)
    # v7x: 64 MiB per TensorCore -> smaller tiles, leave headroom for neighbours
    return (4 << 20), (32 << 20)


def _choose_blocks(d_model, L, itemsize, target_tile_bytes):
    """Lane-dense tiles of ~target_tile_bytes with a parallel sublane grid axis."""
    sub_mult = 8 if itemsize >= 4 else 16  # 16-bit dtypes pack 2 rows / sublane
    # Lane (minor) axis: full L when modest, else a large multiple of 128.
    block_l = L if L <= 2048 else 2048
    # Sublane axis: size the h tile to ~target_tile_bytes.
    raw = target_tile_bytes // max(1, block_l * itemsize)
    if raw >= d_model:
        block_d = d_model
    else:
        block_d = min(d_model, max(sub_mult, (raw // sub_mult) * sub_mult))
    # Guarantee >= 2 grid steps on a parallel axis for multi-MiB tensors so both
    # v7x TensorCores can share the HBM stream (and megacore on v5e/v6e).
    if (
        block_d == d_model
        and pl.cdiv(L, block_l) == 1
        and d_model * L * itemsize > (4 << 20)
        and d_model >= 2 * sub_mult
    ):
        block_d = max(sub_mult, ((d_model // 2) // sub_mult) * sub_mult)
    return block_d, block_l


# --------------------------------------------------------------------------- #
# Wrapper
# --------------------------------------------------------------------------- #
@functools.partial(jax.jit, static_argnames=("L",))
def explicit_single_decay_filter(h, decay_rates, L):
    """Pallas implementation of ExplicitSingleDecayFilter.filter(L).

    h           : (d_model, L_cache) filter taps (f32 or bf16)
    decay_rates : (d_model,)         per-row decay rates r
    L           : static output length (0 < L <= L_cache)
    returns     : (d_model, L) = h[:, :L] * exp(-r[:, None] * linspace(0,1,L_cache)[:L])
    """
    d_model, L_cache = h.shape
    assert decay_rates.shape == (d_model,)
    assert 0 < L <= L_cache

    itemsize = jnp.dtype(h.dtype).itemsize
    inv_scale = (1.0 / (L_cache - 1)) if L_cache > 1 else 0.0
    # Fold sign and 1/(L_cache-1) into the rates (tiny op, fused into the operand).
    neg_scaled_rates = (
        -(decay_rates.astype(jnp.float32)) * jnp.float32(inv_scale)
    ).reshape(d_model, 1)

    target_tile_bytes, vmem_ceiling = _chip_tile_params()
    block_d, block_l = _choose_blocks(d_model, L, itemsize, target_tile_bytes)
    grid = (pl.cdiv(d_model, block_d), pl.cdiv(L, block_l))

    # Avoid a standalone HBM copy of h[:, :L] whenever the lane blocking can
    # address the full cached array directly; otherwise fuse the slice into the
    # pallas_call operand (allow_input_fusion below).
    full_input = (L == L_cache) or (L % 128 == 0)
    h_in = h if full_input else h[:, :L]

    tile_bytes = block_d * block_l * itemsize
    vmem_limit = int(min(vmem_ceiling, max(16 << 20, 4 * tile_bytes + (4 << 20))))

    kernel = functools.partial(_fused_decay_filter_kernel, block_l=block_l)

    return pl.pallas_call(
        kernel,
        out_shape=jax.ShapeDtypeStruct((d_model, L), h.dtype),
        grid_spec=pltpu.PrefetchScalarGridSpec(
            num_scalar_prefetch=0,
            grid=grid,
            in_specs=[
                pl.BlockSpec((block_d, block_l), lambda i, j: (i, j)),  # h
                pl.BlockSpec((block_d, 1), lambda i, j: (i, 0)),        # -r/(Lc-1)
            ],
            out_specs=pl.BlockSpec((block_d, block_l), lambda i, j: (i, j)),
        ),
        compiler_params=pltpu.CompilerParams(
            dimension_semantics=("parallel", "parallel"),
            vmem_limit_bytes=vmem_limit,
            allow_input_fusion=[True, True],
        ),
        cost_estimate=pl.CostEstimate(
            flops=2 * d_model * L,
            transcendentals=d_model * L,
            bytes_accessed=2 * d_model * L * itemsize,
        ),
    )(h_in, neg_scaled_rates)


# --------------------------------------------------------------------------- #
# Parameter init (mirrors the PyTorch __init__, single-rank case)
# --------------------------------------------------------------------------- #
def init_params(
    key,
    d_model,
    L_cache,
    *,
    decay_preset="strong",
    num_decay_repeats=1,
    small_init=True,
    unit_passthrough=False,
):
    """Returns (h, decay_rates); the decay buffer itself is rebuilt in-kernel."""
    assert decay_preset in ("strong", "normal", "weak")
    if decay_preset == "strong":
        log_r_min, log_r_max = 0, 2
    elif decay_preset == "normal":
        log_r_min, log_r_max = -1, 2
    else:
        log_r_min, log_r_max = -2, 2

    h = jax.random.normal(key, (d_model, L_cache), dtype=jnp.float32) / math.sqrt(
        L_cache
    )
    if small_init:
        h = h * 1e-5
    if unit_passthrough:
        h = h.at[:, :1].set(1.0)

    # model_parallel_size = 1, rank = 0
    global_d_model = d_model // num_decay_repeats
    rates = 10.0 ** jnp.linspace(log_r_min, log_r_max, global_d_model, dtype=jnp.float32)
    rates = jnp.tile(rates, (num_decay_repeats,))[:d_model]  # (d_model,)
    return h, rates


if __name__ == "__main__":
    # Test 1: L < L_cache and NOT a multiple of 128 -> fused-slice path.
    d_model, L_cache, L = 32, 256, 160
    key = jax.random.PRNGKey(0)
    h, rates = init_params(key, d_model, L_cache)

    out = jax.block_until_ready(explicit_single_decay_filter(h, rates, L))

    t = jnp.linspace(0.0, 1.0, L_cache, dtype=jnp.float32)
    ref = h[:, :L] * jnp.exp(-rates[:, None] * t[None, :L])
    assert out.shape == (d_model, L) and out.dtype == h.dtype
    assert jnp.allclose(out, ref, rtol=1e-4, atol=1e-30)

    # Test 2: L < L_cache, L % 128 == 0 -> full-h path (no wrapper slice at all).
    d2, Lc2, L2 = 256, 2048, 1920
    h2, r2 = init_params(jax.random.PRNGKey(1), d2, Lc2, decay_preset="normal")
    out2 = jax.block_until_ready(explicit_single_decay_filter(h2, r2, L2))
    t2 = jnp.linspace(0.0, 1.0, Lc2, dtype=jnp.float32)
    ref2 = h2[:, :L2] * jnp.exp(-r2[:, None] * t2[None, :L2])
    assert out2.shape == (d2, L2)
    assert jnp.allclose(out2, ref2, rtol=1e-4, atol=1e-30)

    print("KERNEL_OK")
</pallas_src>

<mosaic_0001>
module attributes {stable_mosaic.version = 11 : i64} {
  func.func @_fused_decay_filter_kernel(%arg0: i32, %arg1: i32, %arg2: memref<32x160xf32, #tpu.memory_space<vmem>>, %arg3: memref<32x1xf32, #tpu.memory_space<vmem>>, %arg4: memref<32x160xf32, #tpu.memory_space<vmem>>) attributes {dimension_semantics = [#tpu.dimension_semantics<parallel>, #tpu.dimension_semantics<parallel>], iteration_bounds = array<i64: 1, 1>, scalar_prefetch = 0 : i64, scratch_operands = 0 : i64, tpu.core_type = #tpu.core_type<tc>, window_params = [{transform_indices = @transform_0, window_bounds = array<i64: 32, 160>}, {transform_indices = @transform_1, window_bounds = array<i64: 32, 1>}, {transform_indices = @transform_2, window_bounds = array<i64: 32, 160>}]} {
    %c160_i32 = arith.constant 160 : i32
    %0 = arith.muli %arg1, %c160_i32 : i32
    %1 = tpu.iota {dimensions = array<i32: 1>} : vector<1x160xi32>
    %2 = vector.broadcast %0 : i32 to vector<1x160xi32>
    %3 = arith.addi %1, %2 : vector<1x160xi32>
    %4 = arith.sitofp %3 : vector<1x160xi32> to vector<1x160xf32>
    %c0 = arith.constant 0 : index
    %c0_0 = arith.constant 0 : index
    %5 = vector.load %arg3[%c0, %c0_0] : memref<32x1xf32, #tpu.memory_space<vmem>>, vector<32x1xf32>
    %6 = vector.broadcast %5 : vector<32x1xf32> to vector<32x160xf32>
    %7 = vector.broadcast %4 : vector<1x160xf32> to vector<32x160xf32>
    %8 = arith.mulf %6, %7 : vector<32x160xf32>
    %9 = math.exp %8 : vector<32x160xf32>
    %c0_1 = arith.constant 0 : index
    %c0_2 = arith.constant 0 : index
    %10 = vector.load %arg2[%c0_1, %c0_2] : memref<32x160xf32, #tpu.memory_space<vmem>>, vector<32x160xf32>
    %11 = arith.mulf %10, %9 : vector<32x160xf32>
    %c0_3 = arith.constant 0 : index
    %c0_4 = arith.constant 0 : index
    %12 = vector.load %arg4[%c0_3, %c0_4] : memref<32x160xf32, #tpu.memory_space<vmem>>, vector<32x160xf32>
    tpu.vector_store %arg4[%c0_3, %c0_4], %11 {strides = array<i32>} : memref<32x160xf32, #tpu.memory_space<vmem>>, vector<32x160xf32>,
    return
  }
  func.func @transform_0(%arg0: i32, %arg1: i32) -> (i32, i32) {
    %c0_i32 = arith.constant 0 : i32
    return %arg0, %arg1 : i32, i32
  }
  func.func @transform_1(%arg0: i32, %arg1: i32) -> (i32, i32) {
    %c0_i32 = arith.constant 0 : i32
    %c0_i32_0 = arith.constant 0 : i32
    return %arg0, %c0_i32 : i32, i32
  }
  func.func @transform_2(%arg0: i32, %arg1: i32) -> (i32, i32) {
    %c0_i32 = arith.constant 0 : i32
    return %arg0, %arg1 : i32, i32
  }
}

</mosaic_0001>

<llo_original>
// kernel: explicit_single_decay_filter.2
$region0: #{explicit_single_decay_filter.2}
  #allocation0 [shape = 'u32[]', space=smem, size = 0x4, offset = 0x4, fixed_abs, tag = 'smem constant byte address 0x4 - core index']
  #allocation1 [shape = 'u32[144,128]{1,0:T(1,128)}', space=vmem, size = 0x12000, scoped, tag = 'internal scratch']
  #allocation2 [shape = 'u32[2048]{0}', space=vmem, size = 0x2000, scoped, tag = 'scoped memory for explicit_single_decay_filter.2']
  #allocation3 [shape = 'u32[2048]{0}', space=vmem, size = 0x2000, scoped, tag = 'scoped memory for explicit_single_decay_filter.2']
  #allocation4 [shape = 'u32[2048]{0}', space=vmem, size = 0x2000, scoped, tag = 'scoped memory for explicit_single_decay_filter.2']
  #allocation5 [shape = 'u32[2048]{0}', space=vmem, size = 0x2000, scoped, tag = 'scoped memory for explicit_single_decay_filter.2']
  #allocation6 [shape = 'u32[2048]{0}', space=vmem, size = 0x2000, scoped, tag = 'scoped memory for explicit_single_decay_filter.2']
  %s0 = inlined_call_operand.vmem [shape: f32[32,1], index: 0, kind: input, shape index: {}]
  %s1 = inlined_call_operand.hbm [shape: f32[32,256], index: 1, kind: input, shape index: {}]
  %s2 = inlined_call_operand.hbm [shape: f32[32,160], index: 2, kind: output, shape index: {}]
  %s3 = sld [smem:[#allocation0]]
  $region22: #{explicit_single_decay_filter.2} parent=0
    _
  %s5 = ssub.s32 1, %s3
  %s6 = scalar_select 0, %s5, %s3
  $region1: #{explicit_single_decay_filter.2} parent=0
    #allocation7 [shape = 'u8[32768]{0}', space=vmem, size = 0x8000, scoped, tag = 'operand span for operand 1']
    #allocation8 [shape = 's32[1]{0}', space=sflag, size = 0x4, scoped, tag = 'scoped memory for explicit_single_decay_filter.2']
    #allocation9 [shape = 's32[1]{0}', space=sflag, size = 0x4, scoped, tag = 'scoped memory for explicit_single_decay_filter.2']
    #allocation10 [shape = 'u8[32768]{0}', space=vmem, size = 0x8000, scoped, tag = 'output window, operand 0, single buffered']
    #allocation11 [shape = 'u8[32768]{0}', space=vmem, size = 0x8000, dematerialized = true, scoped, tag = 'FusionAdapter Buffer %fusion.1 = f32[32,160]{1,0:T(8,128)} fusion(%param_1.1), kind=kLoop, calls=%fused_computation.1.clone, metadata={op_name="jit(explicit_single_decay_filter)/slice" stack_frame_id=9}']
    %7 = vsyncpa [#allocation8], 0
    %8 = vsyncpa [#allocation9], 0
    // Predicated region
    $region2: #{explicit_single_decay_filter.2} parent=1 // pred_check
      _
    $region3: #{explicit_single_decay_filter.2} parent=1 // pred_check_branch
      %10 = sbr.rel (0) target = $region5
    $region4: #{explicit_single_decay_filter.2} parent=1 // pred_region
      %s12 = ssub.s32 1024, 1024
      %13 = vsyncadd [#allocation8], %s12
      %s14 = sshll.u32 [#allocation7], 4
      %s15 = int_to_ptr.vmem [resolvable:$true] %s14
      %20 = dma.hbm_to_vmem [thread:$0]  %s1, 1024, %s15, [#allocation8], 256, 256, 16
    $region5: #{explicit_single_decay_filter.2} parent=1 // pred_fallthru
      _
    // Predicated region
    $region6: #{explicit_single_decay_filter.2} parent=1 // pred_check
      _
    $region7: #{explicit_single_decay_filter.2} parent=1 // pred_check_branch
      %22 = sbr.rel (0) target = $region9
    $region8: #{explicit_single_decay_filter.2} parent=1 // pred_region
      _
    $region9: #{explicit_single_decay_filter.2} parent=1 // pred_fallthru
      _
    // Predicated region
    $region10: #{explicit_single_decay_filter.2} parent=1 // pred_check
      _
    $region11: #{explicit_single_decay_filter.2} parent=1 // pred_check_branch
      %24 = sbr.rel (0) target = $region13
    $region12: #{explicit_single_decay_filter.2} parent=1 // pred_region
      %25 = dma.done [#allocation8], 1024
    $region13: #{explicit_single_decay_filter.2} parent=1 // pred_fallthru
      _
    %v26 = vld [vmem:[#allocation7] sm:$0xff]
    %s28 = ssub.s32 256, 1
    %29 = vst [vmem:[#allocation11] sm:%s28] %v26
    %s30 = scalar_lea.vmem [#allocation7], 8
    %v31 = vld [vmem:[%s30] sm:$0xff]
    %s32 = scalar_lea.vmem [#allocation11], 8
    %s34 = ssub.s32 256, 1
    %35 = vst [vmem:[%s32] sm:%s34] %v31
    %s36 = scalar_lea.vmem [#allocation7], 16
    %v37 = vld [vmem:[%s36] sm:$0xff]
    %s38 = scalar_lea.vmem [#allocation11], 16
    %s40 = ssub.s32 256, 1
    %41 = vst [vmem:[%s38] sm:%s40] %v37
    %s42 = scalar_lea.vmem [#allocation7], 24
    %v43 = vld [vmem:[%s42] sm:$0xff]
    %s44 = scalar_lea.vmem [#allocation11], 24
    %s46 = ssub.s32 256, 1
    %47 = vst [vmem:[%s44] sm:%s46] %v43
    %s48 = scalar_lea.vmem [#allocation7], 32
    %v49 = vld [vmem:[%s48] sm:$0xff]
    %s50 = scalar_lea.vmem [#allocation11], 32
    %s52 = ssub.s32 256, 1
    %53 = vst [vmem:[%s50] sm:%s52] %v49
    %s54 = scalar_lea.vmem [#allocation7], 40
    %v55 = vld [vmem:[%s54] sm:$0xff]
    %s56 = scalar_lea.vmem [#allocation11], 40
    %s58 = ssub.s32 256, 1
    %59 = vst [vmem:[%s56] sm:%s58] %v55
    %s60 = scalar_lea.vmem [#allocation7], 48
    %v61 = vld [vmem:[%s60] sm:$0xff]
    %s62 = scalar_lea.vmem [#allocation11], 48
    %s64 = ssub.s32 256, 1
    %65 = vst [vmem:[%s62] sm:%s64] %v61
    %s66 = scalar_lea.vmem [#allocation7], 56
    %v67 = vld [vmem:[%s66] sm:$0xff]
    %s68 = scalar_lea.vmem [#allocation11], 56
    %s70 = ssub.s32 256, 1
    %71 = vst [vmem:[%s68] sm:%s70] %v67
    %s72 = smul.u32 0, 160
    %v73 = vlaneseq
    %v74 = vand.u32 %v73, 127
    %v75 = vadd.s32 %v74, 128
    %v76 = vstv %s72
    %v77 = vadd.s32 %v74, %v76
    %v78 = vadd.s32 %v75, %v76
    %v79 = vcvt.s32.f32 %v77
    %v80 = vcvt.s32.f32 %v78
    %v81 = vld [vmem:[%s0] sm:$0xff]
    %v82 = vld [vmem:[%s0 + $0x8] sm:$0xff]
    %v83 = vld [vmem:[%s0 + $0x10] sm:$0xff]
    %v84 = vld [vmem:[%s0 + $0x18] sm:$0xff]
    %86 = vset.pattern.permute.xlu0 0
    %87 = vperm.xlu0 %86, %v81
    %v88 = vpop.permute.xlu0 %87
    %91 = vset.pattern.permute.xlu0 0
    %92 = vperm.xlu0 %91, %v82
    %v93 = vpop.permute.xlu0 %92
    %96 = vset.pattern.permute.xlu0 0
    %97 = vperm.xlu0 %96, %v83
    %v98 = vpop.permute.xlu0 %97
    %101 = vset.pattern.permute.xlu0 0
    %102 = vperm.xlu0 %101, %v84
    %v103 = vpop.permute.xlu0 %102
    %v105 = vmul.f32 %v88, %v79
    %v106 = vmul.f32 %v88, %v80
    %v107 = vmul.f32 %v93, %v79
    %v108 = vmul.f32 %v93, %v80
    %v109 = vmul.f32 %v98, %v79
    %v110 = vmul.f32 %v98, %v80
    %v111 = vmul.f32 %v103, %v79
    %v112 = vmul.f32 %v103, %v80
    %v113 = vmul.f32 %v105, 1.442695
    %v114 = vpow.pop %v113
    %v115 = vmul.f32 %v106, 1.442695
    %v116 = vpow.pop %v115
    %v117 = vmul.f32 %v107, 1.442695
    %v118 = vpow.pop %v117
    %v119 = vmul.f32 %v108, 1.442695
    %v120 = vpow.pop %v119
    %v121 = vmul.f32 %v109, 1.442695
    %v122 = vpow.pop %v121
    %v123 = vmul.f32 %v110, 1.442695
    %v124 = vpow.pop %v123
    %v125 = vmul.f32 %v111, 1.442695
    %v126 = vpow.pop %v125
    %v127 = vmul.f32 %v112, 1.442695
    %v128 = vpow.pop %v127
    %v129 = vld [vmem:[#allocation11] sm:$0xff]
    %v130 = vld [vmem:[#allocation11 + $0x8] sm:$0xff]
    %v131 = vld [vmem:[#allocation11 + $0x10] sm:$0xff]
    %v132 = vld [vmem:[#allocation11 + $0x18] sm:$0xff]
    %v133 = vld [vmem:[#allocation11 + $0x20] sm:$0xff]
    %v134 = vld [vmem:[#allocation11 + $0x28] sm:$0xff]
    %v135 = vld [vmem:[#allocation11 + $0x30] sm:$0xff]
    %v136 = vld [vmem:[#allocation11 + $0x38] sm:$0xff]
    %v137 = vmul.f32 %v129, %v114
    %v138 = vmul.f32 %v130, %v116
    %v139 = vmul.f32 %v131, %v118
    %v140 = vmul.f32 %v132, %v120
    %v141 = vmul.f32 %v133, %v122
    %v142 = vmul.f32 %v134, %v124
    %v143 = vmul.f32 %v135, %v126
    %v144 = vmul.f32 %v136, %v128
    %145 = vst [vmem:[#allocation10] sm:$0xff] %v137
    %vm146 = vcmask 261120
    %147 = vst.msk [vmem:[#allocation10 + $0x8] sm:$0xff] %vm146, %v138
    %148 = vst [vmem:[#allocation10 + $0x10] sm:$0xff] %v139
    %149 = vst.msk [vmem:[#allocation10 + $0x18] sm:$0xff] %vm146, %v140
    %150 = vst [vmem:[#allocation10 + $0x20] sm:$0xff] %v141
    %151 = vst.msk [vmem:[#allocation10 + $0x28] sm:$0xff] %vm146, %v142
    %152 = vst [vmem:[#allocation10 + $0x30] sm:$0xff] %v143
    %153 = vst.msk [vmem:[#allocation10 + $0x38] sm:$0xff] %vm146, %v144
    // Predicated region
    $region14: #{explicit_single_decay_filter.2} parent=1 // pred_check
      _
    $region15: #{explicit_single_decay_filter.2} parent=1 // pred_check_branch
      %155 = sbr.rel (0) target = $region17
    $region16: #{explicit_single_decay_filter.2} parent=1 // pred_region
      %s157 = ssub.s32 1024, 1024
      %158 = vsyncadd [#allocation9], %s157
      %s159 = sshll.u32 [#allocation10], 4
      %s160 = int_to_ptr.vmem [resolvable:$true] %s159
      %165 = dma.vmem_to_hbm [thread:$0]  %s160, 1024, %s2, [#allocation9], 256, 256, 16
    $region17: #{explicit_single_decay_filter.2} parent=1 // pred_fallthru
      _
    // Predicated region
    $region18: #{explicit_single_decay_filter.2} parent=1 // pred_check
      _
    $region19: #{explicit_single_decay_filter.2} parent=1 // pred_check_branch
      %167 = sbr.rel (0) target = $region21
    $region20: #{explicit_single_decay_filter.2} parent=1 // pred_region
      %168 = dma.done [#allocation9], 1024
    $region21: #{explicit_single_decay_filter.2} parent=1 // pred_fallthru
      _
    %169 = vsyncpa [#allocation8], 1
    %170 = vsyncpa [#allocation9], 1

</llo_original>
